<compile_context>
chip_gen: v7x
topology: tpu7x:2x2x1
jax: 0.10.0
libtpu: 0.0.40
codegen_flags: <defaults>
</compile_context>

<pallas_src>
import functools

import jax
import jax.numpy as jnp
import numpy as np
from jax.experimental import pallas as pl
from jax.experimental.pallas import tpu as pltpu

THRESH = 1.0                 # sinabs IAF default spike_threshold
INV_THRESH = 1.0 / THRESH    # folded at trace time (no per-step divide)


def _snn_kernel(x_ref, w1_ref, b1_ref, w2_ref, b2_ref, w3_ref, b3_ref,
                w4_ref, b4_ref, o_ref, s_hid, *, T, B):
    """x_ref: (T*B, 2) time-major-flattened input.  o_ref: (T*B, O_pad)."""

    def iaf_scan(z, dst_ref):
        """Sequential integrate-and-fire over time on a batched pre-activation.

        z: (T*B, F) value (row t*B + b  <-> timestep t, batch b).
        Spikes for every timestep are written into dst_ref (same layout).
        Fully unrolled: T is static and small, so the VPU ops of consecutive
        timesteps can interleave around the true membrane-carry dependence.
        """
        F = z.shape[-1]
        v = jnp.zeros((B, F), jnp.float32)          # membrane potential carry
        for t in range(T):                          # static -> full unroll
            vt = v + z[t * B:(t + 1) * B, :]        # integrate
            # MultiSpike: spikes = max(floor(v / thr), 0)
            s = jnp.maximum(jnp.floor(vt * INV_THRESH), 0.0)
            dst_ref[t * B:(t + 1) * B, :] = s
            v = vt - s * THRESH                     # MembraneSubtract reset

    x = x_ref[...]                                                  # (T*B, 2)

    # ---- Layer 1 (Linear 2->H): contraction depth 2 -> VPU broadcast-FMAs,
    #      batched over all T*B rows, bias added once. ----
    z1 = (x[:, 0:1] * w1_ref[0:1, :]
          + x[:, 1:2] * w1_ref[1:2, :]
          + b1_ref[...])                                            # (T*B, H)
    iaf_scan(z1, s_hid)

    # ---- Layer 2 (Linear H->H), one batched MXU matmul over all timesteps ----
    z2 = jnp.dot(s_hid[...], w2_ref[...],
                 preferred_element_type=jnp.float32) + b2_ref[...]  # (T*B, H)
    iaf_scan(z2, s_hid)                                             # scratch reused

    # ---- Layer 3 (Linear H->H) ----
    z3 = jnp.dot(s_hid[...], w3_ref[...],
                 preferred_element_type=jnp.float32) + b3_ref[...]  # (T*B, H)
    iaf_scan(z3, s_hid)

    # ---- Layer 4 (Linear H->O, padded to 128 lanes) + spike_output IAF ----
    z4 = jnp.dot(s_hid[...], w4_ref[...],
                 preferred_element_type=jnp.float32) + b4_ref[...]  # (T*B, 128)
    iaf_scan(z4, o_ref)                                             # lane-dense stores


def snn_forward(x_btf, params):
    """x_btf: (B, T, 2) float32 -> (B, T, 5) float32 spike counts."""
    w1, b1, w2, b2, w3, b3, w4, b4 = params
    B, T, F_in = x_btf.shape
    H = w1.shape[1]
    O = w4.shape[1]
    O_pad = 128  # lane-dense output slab; real channels sliced out below

    # time-major flatten: row (t*B + b) corresponds to timestep t, batch b
    x_tb = (jnp.transpose(x_btf, (1, 0, 2))
            .reshape(T * B, F_in).astype(jnp.float32))

    # Pad the output Linear to 128 columns with zeros: padded columns get zero
    # pre-activation -> zero membrane -> zero spikes, so semantics are unchanged.
    w4p = jnp.zeros((H, O_pad), jnp.float32).at[:, :O].set(w4)
    b4p = jnp.zeros((1, O_pad), jnp.float32).at[:, :O].set(b4)

    kernel = functools.partial(_snn_kernel, T=T, B=B)
    out_2d = pl.pallas_call(
        kernel,
        out_shape=jax.ShapeDtypeStruct((T * B, O_pad), jnp.float32),
        in_specs=[pl.BlockSpec(memory_space=pltpu.MemorySpace.VMEM)] * 9,
        out_specs=pl.BlockSpec(memory_space=pltpu.MemorySpace.VMEM),
        scratch_shapes=[
            pltpu.VMEM((T * B, H), jnp.float32),  # spikes of hidden IAFs (reused)
        ],
    )(x_tb, w1, b1, w2, b2, w3, b3, w4p, b4p)

    out_tbo = out_2d[:, :O].reshape(T, B, O)
    return jnp.transpose(out_tbo, (1, 0, 2))  # (B, T, 5)


def snn_reference(x_btf, params):
    """Pure-JAX reference replicating the PyTorch/sinabs forward."""
    w1, b1, w2, b2, w3, b3, w4, b4 = params

    def iaf_scan(z_btf):  # z: (B, T, F)
        z_tbf = jnp.transpose(z_btf, (1, 0, 2))
        v0 = jnp.zeros(z_tbf.shape[1:], jnp.float32)

        def step(v, zt):
            v = v + zt
            s = jnp.maximum(jnp.floor(v / THRESH), 0.0)
            return v - s * THRESH, s

        _, s_tbf = jax.lax.scan(step, v0, z_tbf)
        return jnp.transpose(s_tbf, (1, 0, 2))

    h = iaf_scan(x_btf @ w1 + b1)
    h = iaf_scan(h @ w2 + b2)
    h = iaf_scan(h @ w3 + b3)
    return iaf_scan(h @ w4 + b4)


def init_params(key, in_dim=2, hidden_dim=32, out_dim=5):
    """Deterministic PyTorch-Linear-style init; weights stored as (in, out)."""
    ks = jax.random.split(key, 8)

    def linear_init(kw, kb, fan_in, fan_out):
        bound = 1.0 / np.sqrt(fan_in)
        w = jax.random.uniform(kw, (fan_in, fan_out), jnp.float32, -bound, bound)
        b = jax.random.uniform(kb, (1, fan_out), jnp.float32, -bound, bound)
        return w, b

    w1, b1 = linear_init(ks[0], ks[1], in_dim, hidden_dim)
    w2, b2 = linear_init(ks[2], ks[3], hidden_dim, hidden_dim)
    w3, b3 = linear_init(ks[4], ks[5], hidden_dim, hidden_dim)
    w4, b4 = linear_init(ks[6], ks[7], hidden_dim, out_dim)
    return (w1, b1, w2, b2, w3, b3, w4, b4)


if __name__ == "__main__":
    B, T, F_IN, H, F_OUT = 2, 8, 2, 32, 5

    key = jax.random.PRNGKey(0)
    k_x, k_p = jax.random.split(key)
    params = init_params(k_p, F_IN, H, F_OUT)
    # scale inputs up a bit so the integrate-and-fire neurons actually spike
    x = 4.0 * jax.random.normal(k_x, (B, T, F_IN), jnp.float32)

    out = jax.block_until_ready(snn_forward(x, params))
    ref = jax.block_until_ready(snn_reference(x, params))

    assert out.shape == (B, T, F_OUT), out.shape
    if not np.allclose(np.asarray(out), np.asarray(ref), atol=1e-5, rtol=1e-5):
        raise AssertionError("Pallas kernel output does not match JAX reference")

    print("KERNEL_OK")
</pallas_src>

<mosaic_0001>
module attributes {stable_mosaic.version = 11 : i64} {
  func.func @_snn_kernel(%arg0: memref<16x2xf32, #tpu.memory_space<vmem>>, %arg1: memref<2x32xf32, #tpu.memory_space<vmem>>, %arg2: memref<1x32xf32, #tpu.memory_space<vmem>>, %arg3: memref<32x32xf32, #tpu.memory_space<vmem>>, %arg4: memref<1x32xf32, #tpu.memory_space<vmem>>, %arg5: memref<32x32xf32, #tpu.memory_space<vmem>>, %arg6: memref<1x32xf32, #tpu.memory_space<vmem>>, %arg7: memref<32x128xf32, #tpu.memory_space<vmem>>, %arg8: memref<1x128xf32, #tpu.memory_space<vmem>>, %arg9: memref<16x128xf32, #tpu.memory_space<vmem>>, %arg10: memref<16x32xf32, #tpu.memory_space<vmem>>) attributes {dimension_semantics = [], scalar_prefetch = 0 : i64, scratch_operands = 1 : i64, tpu.core_type = #tpu.core_type<tc>} {
    %c0 = arith.constant 0 : index
    %c0_0 = arith.constant 0 : index
    %0 = vector.load %arg0[%c0, %c0_0] : memref<16x2xf32, #tpu.memory_space<vmem>>, vector<16x2xf32>
    %1 = vector.extract_strided_slice %0 {offsets = [0, 0], sizes = [16, 1], strides = [1, 1]} : vector<16x2xf32> to vector<16x1xf32>
    %c0_1 = arith.constant 0 : index
    %c0_2 = arith.constant 0 : index
    %2 = vector.load %arg1[%c0_1, %c0_2] : memref<2x32xf32, #tpu.memory_space<vmem>>, vector<1x32xf32>
    %3 = vector.broadcast %1 : vector<16x1xf32> to vector<16x32xf32>
    %4 = vector.broadcast %2 : vector<1x32xf32> to vector<16x32xf32>
    %5 = arith.mulf %3, %4 : vector<16x32xf32>
    %6 = vector.extract_strided_slice %0 {offsets = [0, 1], sizes = [16, 1], strides = [1, 1]} : vector<16x2xf32> to vector<16x1xf32>
    %c1 = arith.constant 1 : index
    %c0_3 = arith.constant 0 : index
    %7 = vector.load %arg1[%c1, %c0_3] : memref<2x32xf32, #tpu.memory_space<vmem>>, vector<1x32xf32>
    %8 = vector.broadcast %6 : vector<16x1xf32> to vector<16x32xf32>
    %9 = vector.broadcast %7 : vector<1x32xf32> to vector<16x32xf32>
    %10 = arith.mulf %8, %9 : vector<16x32xf32>
    %11 = arith.addf %5, %10 : vector<16x32xf32>
    %c0_4 = arith.constant 0 : index
    %c0_5 = arith.constant 0 : index
    %12 = vector.load %arg2[%c0_4, %c0_5] : memref<1x32xf32, #tpu.memory_space<vmem>>, vector<1x32xf32>
    %13 = vector.broadcast %12 : vector<1x32xf32> to vector<16x32xf32>
    %14 = arith.addf %11, %13 : vector<16x32xf32>
    %cst = arith.constant 0.000000e+00 : f32
    %15 = vector.broadcast %cst : f32 to vector<2x32xf32>
    %16 = vector.extract_strided_slice %14 {offsets = [0, 0], sizes = [2, 32], strides = [1, 1]} : vector<16x32xf32> to vector<2x32xf32>
    %17 = arith.addf %15, %16 : vector<2x32xf32>
    %cst_6 = arith.constant 1.000000e+00 : f32
    %18 = vector.broadcast %cst_6 : f32 to vector<2x32xf32>
    %19 = arith.mulf %17, %18 : vector<2x32xf32>
    %20 = math.floor %19 : vector<2x32xf32>
    %cst_7 = arith.constant 0.000000e+00 : f32
    %21 = vector.broadcast %cst_7 : f32 to vector<2x32xf32>
    %22 = arith.maximumf %20, %21 : vector<2x32xf32>
    %c0_8 = arith.constant 0 : index
    %c0_9 = arith.constant 0 : index
    %23 = vector.load %arg10[%c0_8, %c0_9] : memref<16x32xf32, #tpu.memory_space<vmem>>, vector<2x32xf32>
    tpu.vector_store %arg10[%c0_8, %c0_9], %22 {strides = array<i32>} : memref<16x32xf32, #tpu.memory_space<vmem>>, vector<2x32xf32>,
    %cst_10 = arith.constant 1.000000e+00 : f32
    %24 = vector.broadcast %cst_10 : f32 to vector<2x32xf32>
    %25 = arith.mulf %22, %24 : vector<2x32xf32>
    %26 = arith.subf %17, %25 : vector<2x32xf32>
    %27 = vector.extract_strided_slice %14 {offsets = [2, 0], sizes = [2, 32], strides = [1, 1]} : vector<16x32xf32> to vector<2x32xf32>
    %28 = arith.addf %26, %27 : vector<2x32xf32>
    %cst_11 = arith.constant 1.000000e+00 : f32
    %29 = vector.broadcast %cst_11 : f32 to vector<2x32xf32>
    %30 = arith.mulf %28, %29 : vector<2x32xf32>
    %31 = math.floor %30 : vector<2x32xf32>
    %cst_12 = arith.constant 0.000000e+00 : f32
    %32 = vector.broadcast %cst_12 : f32 to vector<2x32xf32>
    %33 = arith.maximumf %31, %32 : vector<2x32xf32>
    %c2 = arith.constant 2 : index
    %c0_13 = arith.constant 0 : index
    %34 = vector.load %arg10[%c2, %c0_13] : memref<16x32xf32, #tpu.memory_space<vmem>>, vector<2x32xf32>
    tpu.vector_store %arg10[%c2, %c0_13], %33 {strides = array<i32>} : memref<16x32xf32, #tpu.memory_space<vmem>>, vector<2x32xf32>,
    %cst_14 = arith.constant 1.000000e+00 : f32
    %35 = vector.broadcast %cst_14 : f32 to vector<2x32xf32>
    %36 = arith.mulf %33, %35 : vector<2x32xf32>
    %37 = arith.subf %28, %36 : vector<2x32xf32>
    %38 = vector.extract_strided_slice %14 {offsets = [4, 0], sizes = [2, 32], strides = [1, 1]} : vector<16x32xf32> to vector<2x32xf32>
    %39 = arith.addf %37, %38 : vector<2x32xf32>
    %cst_15 = arith.constant 1.000000e+00 : f32
    %40 = vector.broadcast %cst_15 : f32 to vector<2x32xf32>
    %41 = arith.mulf %39, %40 : vector<2x32xf32>
    %42 = math.floor %41 : vector<2x32xf32>
    %cst_16 = arith.constant 0.000000e+00 : f32
    %43 = vector.broadcast %cst_16 : f32 to vector<2x32xf32>
    %44 = arith.maximumf %42, %43 : vector<2x32xf32>
    %c4 = arith.constant 4 : index
    %c0_17 = arith.constant 0 : index
    %45 = vector.load %arg10[%c4, %c0_17] : memref<16x32xf32, #tpu.memory_space<vmem>>, vector<2x32xf32>
    tpu.vector_store %arg10[%c4, %c0_17], %44 {strides = array<i32>} : memref<16x32xf32, #tpu.memory_space<vmem>>, vector<2x32xf32>,
    %cst_18 = arith.constant 1.000000e+00 : f32
    %46 = vector.broadcast %cst_18 : f32 to vector<2x32xf32>
    %47 = arith.mulf %44, %46 : vector<2x32xf32>
    %48 = arith.subf %39, %47 : vector<2x32xf32>
    %49 = vector.extract_strided_slice %14 {offsets = [6, 0], sizes = [2, 32], strides = [1, 1]} : vector<16x32xf32> to vector<2x32xf32>
    %50 = arith.addf %48, %49 : vector<2x32xf32>
    %cst_19 = arith.constant 1.000000e+00 : f32
    %51 = vector.broadcast %cst_19 : f32 to vector<2x32xf32>
    %52 = arith.mulf %50, %51 : vector<2x32xf32>
    %53 = math.floor %52 : vector<2x32xf32>
    %cst_20 = arith.constant 0.000000e+00 : f32
    %54 = vector.broadcast %cst_20 : f32 to vector<2x32xf32>
    %55 = arith.maximumf %53, %54 : vector<2x32xf32>
    %c6 = arith.constant 6 : index
    %c0_21 = arith.constant 0 : index
    %56 = vector.load %arg10[%c6, %c0_21] : memref<16x32xf32, #tpu.memory_space<vmem>>, vector<2x32xf32>
    tpu.vector_store %arg10[%c6, %c0_21], %55 {strides = array<i32>} : memref<16x32xf32, #tpu.memory_space<vmem>>, vector<2x32xf32>,
    %cst_22 = arith.constant 1.000000e+00 : f32
    %57 = vector.broadcast %cst_22 : f32 to vector<2x32xf32>
    %58 = arith.mulf %55, %57 : vector<2x32xf32>
    %59 = arith.subf %50, %58 : vector<2x32xf32>
    %60 = vector.extract_strided_slice %14 {offsets = [8, 0], sizes = [2, 32], strides = [1, 1]} : vector<16x32xf32> to vector<2x32xf32>
    %61 = arith.addf %59, %60 : vector<2x32xf32>
    %cst_23 = arith.constant 1.000000e+00 : f32
    %62 = vector.broadcast %cst_23 : f32 to vector<2x32xf32>
    %63 = arith.mulf %61, %62 : vector<2x32xf32>
    %64 = math.floor %63 : vector<2x32xf32>
    %cst_24 = arith.constant 0.000000e+00 : f32
    %65 = vector.broadcast %cst_24 : f32 to vector<2x32xf32>
    %66 = arith.maximumf %64, %65 : vector<2x32xf32>
    %c8 = arith.constant 8 : index
    %c0_25 = arith.constant 0 : index
    %67 = vector.load %arg10[%c8, %c0_25] : memref<16x32xf32, #tpu.memory_space<vmem>>, vector<2x32xf32>
    tpu.vector_store %arg10[%c8, %c0_25], %66 {strides = array<i32>} : memref<16x32xf32, #tpu.memory_space<vmem>>, vector<2x32xf32>,
    %cst_26 = arith.constant 1.000000e+00 : f32
    %68 = vector.broadcast %cst_26 : f32 to vector<2x32xf32>
    %69 = arith.mulf %66, %68 : vector<2x32xf32>
    %70 = arith.subf %61, %69 : vector<2x32xf32>
    %71 = vector.extract_strided_slice %14 {offsets = [10, 0], sizes = [2, 32], strides = [1, 1]} : vector<16x32xf32> to vector<2x32xf32>
    %72 = arith.addf %70, %71 : vector<2x32xf32>
    %cst_27 = arith.constant 1.000000e+00 : f32
    %73 = vector.broadcast %cst_27 : f32 to vector<2x32xf32>
    %74 = arith.mulf %72, %73 : vector<2x32xf32>
    %75 = math.floor %74 : vector<2x32xf32>
    %cst_28 = arith.constant 0.000000e+00 : f32
    %76 = vector.broadcast %cst_28 : f32 to vector<2x32xf32>
    %77 = arith.maximumf %75, %76 : vector<2x32xf32>
    %c10 = arith.constant 10 : index
    %c0_29 = arith.constant 0 : index
    %78 = vector.load %arg10[%c10, %c0_29] : memref<16x32xf32, #tpu.memory_space<vmem>>, vector<2x32xf32>
    tpu.vector_store %arg10[%c10, %c0_29], %77 {strides = array<i32>} : memref<16x32xf32, #tpu.memory_space<vmem>>, vector<2x32xf32>,
    %cst_30 = arith.constant 1.000000e+00 : f32
    %79 = vector.broadcast %cst_30 : f32 to vector<2x32xf32>
    %80 = arith.mulf %77, %79 : vector<2x32xf32>
    %81 = arith.subf %72, %80 : vector<2x32xf32>
    %82 = vector.extract_strided_slice %14 {offsets = [12, 0], sizes = [2, 32], strides = [1, 1]} : vector<16x32xf32> to vector<2x32xf32>
    %83 = arith.addf %81, %82 : vector<2x32xf32>
    %cst_31 = arith.constant 1.000000e+00 : f32
    %84 = vector.broadcast %cst_31 : f32 to vector<2x32xf32>
    %85 = arith.mulf %83, %84 : vector<2x32xf32>
    %86 = math.floor %85 : vector<2x32xf32>
    %cst_32 = arith.constant 0.000000e+00 : f32
    %87 = vector.broadcast %cst_32 : f32 to vector<2x32xf32>
    %88 = arith.maximumf %86, %87 : vector<2x32xf32>
    %c12 = arith.constant 12 : index
    %c0_33 = arith.constant 0 : index
    %89 = vector.load %arg10[%c12, %c0_33] : memref<16x32xf32, #tpu.memory_space<vmem>>, vector<2x32xf32>
    tpu.vector_store %arg10[%c12, %c0_33], %88 {strides = array<i32>} : memref<16x32xf32, #tpu.memory_space<vmem>>, vector<2x32xf32>,
    %cst_34 = arith.constant 1.000000e+00 : f32
    %90 = vector.broadcast %cst_34 : f32 to vector<2x32xf32>
    %91 = arith.mulf %88, %90 : vector<2x32xf32>
    %92 = arith.subf %83, %91 : vector<2x32xf32>
    %93 = vector.extract_strided_slice %14 {offsets = [14, 0], sizes = [2, 32], strides = [1, 1]} : vector<16x32xf32> to vector<2x32xf32>
    %94 = arith.addf %92, %93 : vector<2x32xf32>
    %cst_35 = arith.constant 1.000000e+00 : f32
    %95 = vector.broadcast %cst_35 : f32 to vector<2x32xf32>
    %96 = arith.mulf %94, %95 : vector<2x32xf32>
    %97 = math.floor %96 : vector<2x32xf32>
    %cst_36 = arith.constant 0.000000e+00 : f32
    %98 = vector.broadcast %cst_36 : f32 to vector<2x32xf32>
    %99 = arith.maximumf %97, %98 : vector<2x32xf32>
    %c14 = arith.constant 14 : index
    %c0_37 = arith.constant 0 : index
    %100 = vector.load %arg10[%c14, %c0_37] : memref<16x32xf32, #tpu.memory_space<vmem>>, vector<2x32xf32>
    tpu.vector_store %arg10[%c14, %c0_37], %99 {strides = array<i32>} : memref<16x32xf32, #tpu.memory_space<vmem>>, vector<2x32xf32>,
    %c0_38 = arith.constant 0 : index
    %c0_39 = arith.constant 0 : index
    %101 = vector.load %arg10[%c0_38, %c0_39] : memref<16x32xf32, #tpu.memory_space<vmem>>, vector<16x32xf32>
    %c0_40 = arith.constant 0 : index
    %c0_41 = arith.constant 0 : index
    %102 = vector.load %arg3[%c0_40, %c0_41] : memref<32x32xf32, #tpu.memory_space<vmem>>, vector<32x32xf32>
    %cst_42 = arith.constant dense<0.000000e+00> : vector<16x32xf32>
    %103 = tpu.matmul %101, %102, %cst_42 {dimension_numbers = #tpu.dot_dimension_numbers<[1], [0], [0], [1], [0, 0, 1, 1], [], []>} : vector<16x32xf32>, vector<32x32xf32>, vector<16x32xf32> -> vector<16x32xf32>
    %c0_43 = arith.constant 0 : index
    %c0_44 = arith.constant 0 : index
    %104 = vector.load %arg4[%c0_43, %c0_44] : memref<1x32xf32, #tpu.memory_space<vmem>>, vector<1x32xf32>
    %105 = vector.broadcast %104 : vector<1x32xf32> to vector<16x32xf32>
    %106 = arith.addf %103, %105 : vector<16x32xf32>
    %cst_45 = arith.constant 0.000000e+00 : f32
    %107 = vector.broadcast %cst_45 : f32 to vector<2x32xf32>
    %108 = vector.extract_strided_slice %106 {offsets = [0, 0], sizes = [2, 32], strides = [1, 1]} : vector<16x32xf32> to vector<2x32xf32>
    %109 = arith.addf %107, %108 : vector<2x32xf32>
    %cst_46 = arith.constant 1.000000e+00 : f32
    %110 = vector.broadcast %cst_46 : f32 to vector<2x32xf32>
    %111 = arith.mulf %109, %110 : vector<2x32xf32>
    %112 = math.floor %111 : vector<2x32xf32>
    %cst_47 = arith.constant 0.000000e+00 : f32
    %113 = vector.broadcast %cst_47 : f32 to vector<2x32xf32>
    %114 = arith.maximumf %112, %113 : vector<2x32xf32>
    %c0_48 = arith.constant 0 : index
    %c0_49 = arith.constant 0 : index
    %115 = vector.load %arg10[%c0_48, %c0_49] : memref<16x32xf32, #tpu.memory_space<vmem>>, vector<2x32xf32>
    tpu.vector_store %arg10[%c0_48, %c0_49], %114 {strides = array<i32>} : memref<16x32xf32, #tpu.memory_space<vmem>>, vector<2x32xf32>,
    %cst_50 = arith.constant 1.000000e+00 : f32
    %116 = vector.broadcast %cst_50 : f32 to vector<2x32xf32>
    %117 = arith.mulf %114, %116 : vector<2x32xf32>
    %118 = arith.subf %109, %117 : vector<2x32xf32>
    %119 = vector.extract_strided_slice %106 {offsets = [2, 0], sizes = [2, 32], strides = [1, 1]} : vector<16x32xf32> to vector<2x32xf32>
    %120 = arith.addf %118, %119 : vector<2x32xf32>
    %cst_51 = arith.constant 1.000000e+00 : f32
    %121 = vector.broadcast %cst_51 : f32 to vector<2x32xf32>
    %122 = arith.mulf %120, %121 : vector<2x32xf32>
    %123 = math.floor %122 : vector<2x32xf32>
    %cst_52 = arith.constant 0.000000e+00 : f32
    %124 = vector.broadcast %cst_52 : f32 to vector<2x32xf32>
    %125 = arith.maximumf %123, %124 : vector<2x32xf32>
    %c2_53 = arith.constant 2 : index
    %c0_54 = arith.constant 0 : index
    %126 = vector.load %arg10[%c2_53, %c0_54] : memref<16x32xf32, #tpu.memory_space<vmem>>, vector<2x32xf32>
    tpu.vector_store %arg10[%c2_53, %c0_54], %125 {strides = array<i32>} : memref<16x32xf32, #tpu.memory_space<vmem>>, vector<2x32xf32>,
    %cst_55 = arith.constant 1.000000e+00 : f32
    %127 = vector.broadcast %cst_55 : f32 to vector<2x32xf32>
    %128 = arith.mulf %125, %127 : vector<2x32xf32>
    %129 = arith.subf %120, %128 : vector<2x32xf32>
    %130 = vector.extract_strided_slice %106 {offsets = [4, 0], sizes = [2, 32], strides = [1, 1]} : vector<16x32xf32> to vector<2x32xf32>
    %131 = arith.addf %129, %130 : vector<2x32xf32>
    %cst_56 = arith.constant 1.000000e+00 : f32
    %132 = vector.broadcast %cst_56 : f32 to vector<2x32xf32>
    %133 = arith.mulf %131, %132 : vector<2x32xf32>
    %134 = math.floor %133 : vector<2x32xf32>
    %cst_57 = arith.constant 0.000000e+00 : f32
    %135 = vector.broadcast %cst_57 : f32 to vector<2x32xf32>
    %136 = arith.maximumf %134, %135 : vector<2x32xf32>
    %c4_58 = arith.constant 4 : index
    %c0_59 = arith.constant 0 : index
    %137 = vector.load %arg10[%c4_58, %c0_59] : memref<16x32xf32, #tpu.memory_space<vmem>>, vector<2x32xf32>
    tpu.vector_store %arg10[%c4_58, %c0_59], %136 {strides = array<i32>} : memref<16x32xf32, #tpu.memory_space<vmem>>, vector<2x32xf32>,
    %cst_60 = arith.constant 1.000000e+00 : f32
    %138 = vector.broadcast %cst_60 : f32 to vector<2x32xf32>
    %139 = arith.mulf %136, %138 : vector<2x32xf32>
    %140 = arith.subf %131, %139 : vector<2x32xf32>
    %141 = vector.extract_strided_slice %106 {offsets = [6, 0], sizes = [2, 32], strides = [1, 1]} : vector<16x32xf32> to vector<2x32xf32>
    %142 = arith.addf %140, %141 : vector<2x32xf32>
    %cst_61 = arith.constant 1.000000e+00 : f32
    %143 = vector.broadcast %cst_61 : f32 to vector<2x32xf32>
    %144 = arith.mulf %142, %143 : vector<2x32xf32>
    %145 = math.floor %144 : vector<2x32xf32>
    %cst_62 = arith.constant 0.000000e+00 : f32
    %146 = vector.broadcast %cst_62 : f32 to vector<2x32xf32>
    %147 = arith.maximumf %145, %146 : vector<2x32xf32>
    %c6_63 = arith.constant 6 : index
    %c0_64 = arith.constant 0 : index
    %148 = vector.load %arg10[%c6_63, %c0_64] : memref<16x32xf32, #tpu.memory_space<vmem>>, vector<2x32xf32>
    tpu.vector_store %arg10[%c6_63, %c0_64], %147 {strides = array<i32>} : memref<16x32xf32, #tpu.memory_space<vmem>>, vector<2x32xf32>,
    %cst_65 = arith.constant 1.000000e+00 : f32
    %149 = vector.broadcast %cst_65 : f32 to vector<2x32xf32>
    %150 = arith.mulf %147, %149 : vector<2x32xf32>
    %151 = arith.subf %142, %150 : vector<2x32xf32>
    %152 = vector.extract_strided_slice %106 {offsets = [8, 0], sizes = [2, 32], strides = [1, 1]} : vector<16x32xf32> to vector<2x32xf32>
    %153 = arith.addf %151, %152 : vector<2x32xf32>
    %cst_66 = arith.constant 1.000000e+00 : f32
    %154 = vector.broadcast %cst_66 : f32 to vector<2x32xf32>
    %155 = arith.mulf %153, %154 : vector<2x32xf32>
    %156 = math.floor %155 : vector<2x32xf32>
    %cst_67 = arith.constant 0.000000e+00 : f32
    %157 = vector.broadcast %cst_67 : f32 to vector<2x32xf32>
    %158 = arith.maximumf %156, %157 : vector<2x32xf32>
    %c8_68 = arith.constant 8 : index
    %c0_69 = arith.constant 0 : index
    %159 = vector.load %arg10[%c8_68, %c0_69] : memref<16x32xf32, #tpu.memory_space<vmem>>, vector<2x32xf32>
    tpu.vector_store %arg10[%c8_68, %c0_69], %158 {strides = array<i32>} : memref<16x32xf32, #tpu.memory_space<vmem>>, vector<2x32xf32>,
    %cst_70 = arith.constant 1.000000e+00 : f32
    %160 = vector.broadcast %cst_70 : f32 to vector<2x32xf32>
    %161 = arith.mulf %158, %160 : vector<2x32xf32>
    %162 = arith.subf %153, %161 : vector<2x32xf32>
    %163 = vector.extract_strided_slice %106 {offsets = [10, 0], sizes = [2, 32], strides = [1, 1]} : vector<16x32xf32> to vector<2x32xf32>
    %164 = arith.addf %162, %163 : vector<2x32xf32>
    %cst_71 = arith.constant 1.000000e+00 : f32
    %165 = vector.broadcast %cst_71 : f32 to vector<2x32xf32>
    %166 = arith.mulf %164, %165 : vector<2x32xf32>
    %167 = math.floor %166 : vector<2x32xf32>
    %cst_72 = arith.constant 0.000000e+00 : f32
    %168 = vector.broadcast %cst_72 : f32 to vector<2x32xf32>
    %169 = arith.maximumf %167, %168 : vector<2x32xf32>
    %c10_73 = arith.constant 10 : index
    %c0_74 = arith.constant 0 : index
    %170 = vector.load %arg10[%c10_73, %c0_74] : memref<16x32xf32, #tpu.memory_space<vmem>>, vector<2x32xf32>
    tpu.vector_store %arg10[%c10_73, %c0_74], %169 {strides = array<i32>} : memref<16x32xf32, #tpu.memory_space<vmem>>, vector<2x32xf32>,
    %cst_75 = arith.constant 1.000000e+00 : f32
    %171 = vector.broadcast %cst_75 : f32 to vector<2x32xf32>
    %172 = arith.mulf %169, %171 : vector<2x32xf32>
    %173 = arith.subf %164, %172 : vector<2x32xf32>
    %174 = vector.extract_strided_slice %106 {offsets = [12, 0], sizes = [2, 32], strides = [1, 1]} : vector<16x32xf32> to vector<2x32xf32>
    %175 = arith.addf %173, %174 : vector<2x32xf32>
    %cst_76 = arith.constant 1.000000e+00 : f32
    %176 = vector.broadcast %cst_76 : f32 to vector<2x32xf32>
    %177 = arith.mulf %175, %176 : vector<2x32xf32>
    %178 = math.floor %177 : vector<2x32xf32>
    %cst_77 = arith.constant 0.000000e+00 : f32
    %179 = vector.broadcast %cst_77 : f32 to vector<2x32xf32>
    %180 = arith.maximumf %178, %179 : vector<2x32xf32>
    %c12_78 = arith.constant 12 : index
    %c0_79 = arith.constant 0 : index
    %181 = vector.load %arg10[%c12_78, %c0_79] : memref<16x32xf32, #tpu.memory_space<vmem>>, vector<2x32xf32>
    tpu.vector_store %arg10[%c12_78, %c0_79], %180 {strides = array<i32>} : memref<16x32xf32, #tpu.memory_space<vmem>>, vector<2x32xf32>,
    %cst_80 = arith.constant 1.000000e+00 : f32
    %182 = vector.broadcast %cst_80 : f32 to vector<2x32xf32>
    %183 = arith.mulf %180, %182 : vector<2x32xf32>
    %184 = arith.subf %175, %183 : vector<2x32xf32>
    %185 = vector.extract_strided_slice %106 {offsets = [14, 0], sizes = [2, 32], strides = [1, 1]} : vector<16x32xf32> to vector<2x32xf32>
    %186 = arith.addf %184, %185 : vector<2x32xf32>
    %cst_81 = arith.constant 1.000000e+00 : f32
    %187 = vector.broadcast %cst_81 : f32 to vector<2x32xf32>
    %188 = arith.mulf %186, %187 : vector<2x32xf32>
    %189 = math.floor %188 : vector<2x32xf32>
    %cst_82 = arith.constant 0.000000e+00 : f32
    %190 = vector.broadcast %cst_82 : f32 to vector<2x32xf32>
    %191 = arith.maximumf %189, %190 : vector<2x32xf32>
    %c14_83 = arith.constant 14 : index
    %c0_84 = arith.constant 0 : index
    %192 = vector.load %arg10[%c14_83, %c0_84] : memref<16x32xf32, #tpu.memory_space<vmem>>, vector<2x32xf32>
    tpu.vector_store %arg10[%c14_83, %c0_84], %191 {strides = array<i32>} : memref<16x32xf32, #tpu.memory_space<vmem>>, vector<2x32xf32>,
    %c0_85 = arith.constant 0 : index
    %c0_86 = arith.constant 0 : index
    %193 = vector.load %arg10[%c0_85, %c0_86] : memref<16x32xf32, #tpu.memory_space<vmem>>, vector<16x32xf32>
    %c0_87 = arith.constant 0 : index
    %c0_88 = arith.constant 0 : index
    %194 = vector.load %arg5[%c0_87, %c0_88] : memref<32x32xf32, #tpu.memory_space<vmem>>, vector<32x32xf32>
    %cst_89 = arith.constant dense<0.000000e+00> : vector<16x32xf32>
    %195 = tpu.matmul %193, %194, %cst_89 {dimension_numbers = #tpu.dot_dimension_numbers<[1], [0], [0], [1], [0, 0, 1, 1], [], []>} : vector<16x32xf32>, vector<32x32xf32>, vector<16x32xf32> -> vector<16x32xf32>
    %c0_90 = arith.constant 0 : index
    %c0_91 = arith.constant 0 : index
    %196 = vector.load %arg6[%c0_90, %c0_91] : memref<1x32xf32, #tpu.memory_space<vmem>>, vector<1x32xf32>
    %197 = vector.broadcast %196 : vector<1x32xf32> to vector<16x32xf32>
    %198 = arith.addf %195, %197 : vector<16x32xf32>
    %cst_92 = arith.constant 0.000000e+00 : f32
    %199 = vector.broadcast %cst_92 : f32 to vector<2x32xf32>
    %200 = vector.extract_strided_slice %198 {offsets = [0, 0], sizes = [2, 32], strides = [1, 1]} : vector<16x32xf32> to vector<2x32xf32>
    %201 = arith.addf %199, %200 : vector<2x32xf32>
    %cst_93 = arith.constant 1.000000e+00 : f32
    %202 = vector.broadcast %cst_93 : f32 to vector<2x32xf32>
    %203 = arith.mulf %201, %202 : vector<2x32xf32>
    %204 = math.floor %203 : vector<2x32xf32>
    %cst_94 = arith.constant 0.000000e+00 : f32
    %205 = vector.broadcast %cst_94 : f32 to vector<2x32xf32>
    %206 = arith.maximumf %204, %205 : vector<2x32xf32>
    %c0_95 = arith.constant 0 : index
    %c0_96 = arith.constant 0 : index
    %207 = vector.load %arg10[%c0_95, %c0_96] : memref<16x32xf32, #tpu.memory_space<vmem>>, vector<2x32xf32>
    tpu.vector_store %arg10[%c0_95, %c0_96], %206 {strides = array<i32>} : memref<16x32xf32, #tpu.memory_space<vmem>>, vector<2x32xf32>,
    %cst_97 = arith.constant 1.000000e+00 : f32
    %208 = vector.broadcast %cst_97 : f32 to vector<2x32xf32>
    %209 = arith.mulf %206, %208 : vector<2x32xf32>
    %210 = arith.subf %201, %209 : vector<2x32xf32>
    %211 = vector.extract_strided_slice %198 {offsets = [2, 0], sizes = [2, 32], strides = [1, 1]} : vector<16x32xf32> to vector<2x32xf32>
    %212 = arith.addf %210, %211 : vector<2x32xf32>
    %cst_98 = arith.constant 1.000000e+00 : f32
    %213 = vector.broadcast %cst_98 : f32 to vector<2x32xf32>
    %214 = arith.mulf %212, %213 : vector<2x32xf32>
    %215 = math.floor %214 : vector<2x32xf32>
    %cst_99 = arith.constant 0.000000e+00 : f32
    %216 = vector.broadcast %cst_99 : f32 to vector<2x32xf32>
    %217 = arith.maximumf %215, %216 : vector<2x32xf32>
    %c2_100 = arith.constant 2 : index
    %c0_101 = arith.constant 0 : index
    %218 = vector.load %arg10[%c2_100, %c0_101] : memref<16x32xf32, #tpu.memory_space<vmem>>, vector<2x32xf32>
    tpu.vector_store %arg10[%c2_100, %c0_101], %217 {strides = array<i32>} : memref<16x32xf32, #tpu.memory_space<vmem>>, vector<2x32xf32>,
    %cst_102 = arith.constant 1.000000e+00 : f32
    %219 = vector.broadcast %cst_102 : f32 to vector<2x32xf32>
    %220 = arith.mulf %217, %219 : vector<2x32xf32>
    %221 = arith.subf %212, %220 : vector<2x32xf32>
    %222 = vector.extract_strided_slice %198 {offsets = [4, 0], sizes = [2, 32], strides = [1, 1]} : vector<16x32xf32> to vector<2x32xf32>
    %223 = arith.addf %221, %222 : vector<2x32xf32>
    %cst_103 = arith.constant 1.000000e+00 : f32
    %224 = vector.broadcast %cst_103 : f32 to vector<2x32xf32>
    %225 = arith.mulf %223, %224 : vector<2x32xf32>
    %226 = math.floor %225 : vector<2x32xf32>
    %cst_104 = arith.constant 0.000000e+00 : f32
    %227 = vector.broadcast %cst_104 : f32 to vector<2x32xf32>
    %228 = arith.maximumf %226, %227 : vector<2x32xf32>
    %c4_105 = arith.constant 4 : index
    %c0_106 = arith.constant 0 : index
    %229 = vector.load %arg10[%c4_105, %c0_106] : memref<16x32xf32, #tpu.memory_space<vmem>>, vector<2x32xf32>
    tpu.vector_store %arg10[%c4_105, %c0_106], %228 {strides = array<i32>} : memref<16x32xf32, #tpu.memory_space<vmem>>, vector<2x32xf32>,
    %cst_107 = arith.constant 1.000000e+00 : f32
    %230 = vector.broadcast %cst_107 : f32 to vector<2x32xf32>
    %231 = arith.mulf %228, %230 : vector<2x32xf32>
    %232 = arith.subf %223, %231 : vector<2x32xf32>
    %233 = vector.extract_strided_slice %198 {offsets = [6, 0], sizes = [2, 32], strides = [1, 1]} : vector<16x32xf32> to vector<2x32xf32>
    %234 = arith.addf %232, %233 : vector<2x32xf32>
    %cst_108 = arith.constant 1.000000e+00 : f32
    %235 = vector.broadcast %cst_108 : f32 to vector<2x32xf32>
    %236 = arith.mulf %234, %235 : vector<2x32xf32>
    %237 = math.floor %236 : vector<2x32xf32>
    %cst_109 = arith.constant 0.000000e+00 : f32
    %238 = vector.broadcast %cst_109 : f32 to vector<2x32xf32>
    %239 = arith.maximumf %237, %238 : vector<2x32xf32>
    %c6_110 = arith.constant 6 : index
    %c0_111 = arith.constant 0 : index
    %240 = vector.load %arg10[%c6_110, %c0_111] : memref<16x32xf32, #tpu.memory_space<vmem>>, vector<2x32xf32>
    tpu.vector_store %arg10[%c6_110, %c0_111], %239 {strides = array<i32>} : memref<16x32xf32, #tpu.memory_space<vmem>>, vector<2x32xf32>,
    %cst_112 = arith.constant 1.000000e+00 : f32
    %241 = vector.broadcast %cst_112 : f32 to vector<2x32xf32>
    %242 = arith.mulf %239, %241 : vector<2x32xf32>
    %243 = arith.subf %234, %242 : vector<2x32xf32>
    %244 = vector.extract_strided_slice %198 {offsets = [8, 0], sizes = [2, 32], strides = [1, 1]} : vector<16x32xf32> to vector<2x32xf32>
    %245 = arith.addf %243, %244 : vector<2x32xf32>
    %cst_113 = arith.constant 1.000000e+00 : f32
    %246 = vector.broadcast %cst_113 : f32 to vector<2x32xf32>
    %247 = arith.mulf %245, %246 : vector<2x32xf32>
    %248 = math.floor %247 : vector<2x32xf32>
    %cst_114 = arith.constant 0.000000e+00 : f32
    %249 = vector.broadcast %cst_114 : f32 to vector<2x32xf32>
    %250 = arith.maximumf %248, %249 : vector<2x32xf32>
    %c8_115 = arith.constant 8 : index
    %c0_116 = arith.constant 0 : index
    %251 = vector.load %arg10[%c8_115, %c0_116] : memref<16x32xf32, #tpu.memory_space<vmem>>, vector<2x32xf32>
    tpu.vector_store %arg10[%c8_115, %c0_116], %250 {strides = array<i32>} : memref<16x32xf32, #tpu.memory_space<vmem>>, vector<2x32xf32>,
    %cst_117 = arith.constant 1.000000e+00 : f32
    %252 = vector.broadcast %cst_117 : f32 to vector<2x32xf32>
    %253 = arith.mulf %250, %252 : vector<2x32xf32>
    %254 = arith.subf %245, %253 : vector<2x32xf32>
    %255 = vector.extract_strided_slice %198 {offsets = [10, 0], sizes = [2, 32], strides = [1, 1]} : vector<16x32xf32> to vector<2x32xf32>
    %256 = arith.addf %254, %255 : vector<2x32xf32>
    %cst_118 = arith.constant 1.000000e+00 : f32
    %257 = vector.broadcast %cst_118 : f32 to vector<2x32xf32>
    %258 = arith.mulf %256, %257 : vector<2x32xf32>
    %259 = math.floor %258 : vector<2x32xf32>
    %cst_119 = arith.constant 0.000000e+00 : f32
    %260 = vector.broadcast %cst_119 : f32 to vector<2x32xf32>
    %261 = arith.maximumf %259, %260 : vector<2x32xf32>
    %c10_120 = arith.constant 10 : index
    %c0_121 = arith.constant 0 : index
    %262 = vector.load %arg10[%c10_120, %c0_121] : memref<16x32xf32, #tpu.memory_space<vmem>>, vector<2x32xf32>
    tpu.vector_store %arg10[%c10_120, %c0_121], %261 {strides = array<i32>} : memref<16x32xf32, #tpu.memory_space<vmem>>, vector<2x32xf32>,
    %cst_122 = arith.constant 1.000000e+00 : f32
    %263 = vector.broadcast %cst_122 : f32 to vector<2x32xf32>
    %264 = arith.mulf %261, %263 : vector<2x32xf32>
    %265 = arith.subf %256, %264 : vector<2x32xf32>
    %266 = vector.extract_strided_slice %198 {offsets = [12, 0], sizes = [2, 32], strides = [1, 1]} : vector<16x32xf32> to vector<2x32xf32>
    %267 = arith.addf %265, %266 : vector<2x32xf32>
    %cst_123 = arith.constant 1.000000e+00 : f32
    %268 = vector.broadcast %cst_123 : f32 to vector<2x32xf32>
    %269 = arith.mulf %267, %268 : vector<2x32xf32>
    %270 = math.floor %269 : vector<2x32xf32>
    %cst_124 = arith.constant 0.000000e+00 : f32
    %271 = vector.broadcast %cst_124 : f32 to vector<2x32xf32>
    %272 = arith.maximumf %270, %271 : vector<2x32xf32>
    %c12_125 = arith.constant 12 : index
    %c0_126 = arith.constant 0 : index
    %273 = vector.load %arg10[%c12_125, %c0_126] : memref<16x32xf32, #tpu.memory_space<vmem>>, vector<2x32xf32>
    tpu.vector_store %arg10[%c12_125, %c0_126], %272 {strides = array<i32>} : memref<16x32xf32, #tpu.memory_space<vmem>>, vector<2x32xf32>,
    %cst_127 = arith.constant 1.000000e+00 : f32
    %274 = vector.broadcast %cst_127 : f32 to vector<2x32xf32>
    %275 = arith.mulf %272, %274 : vector<2x32xf32>
    %276 = arith.subf %267, %275 : vector<2x32xf32>
    %277 = vector.extract_strided_slice %198 {offsets = [14, 0], sizes = [2, 32], strides = [1, 1]} : vector<16x32xf32> to vector<2x32xf32>
    %278 = arith.addf %276, %277 : vector<2x32xf32>
    %cst_128 = arith.constant 1.000000e+00 : f32
    %279 = vector.broadcast %cst_128 : f32 to vector<2x32xf32>
    %280 = arith.mulf %278, %279 : vector<2x32xf32>
    %281 = math.floor %280 : vector<2x32xf32>
    %cst_129 = arith.constant 0.000000e+00 : f32
    %282 = vector.broadcast %cst_129 : f32 to vector<2x32xf32>
    %283 = arith.maximumf %281, %282 : vector<2x32xf32>
    %c14_130 = arith.constant 14 : index
    %c0_131 = arith.constant 0 : index
    %284 = vector.load %arg10[%c14_130, %c0_131] : memref<16x32xf32, #tpu.memory_space<vmem>>, vector<2x32xf32>
    tpu.vector_store %arg10[%c14_130, %c0_131], %283 {strides = array<i32>} : memref<16x32xf32, #tpu.memory_space<vmem>>, vector<2x32xf32>,
    %c0_132 = arith.constant 0 : index
    %c0_133 = arith.constant 0 : index
    %285 = vector.load %arg10[%c0_132, %c0_133] : memref<16x32xf32, #tpu.memory_space<vmem>>, vector<16x32xf32>
    %c0_134 = arith.constant 0 : index
    %c0_135 = arith.constant 0 : index
    %286 = vector.load %arg7[%c0_134, %c0_135] : memref<32x128xf32, #tpu.memory_space<vmem>>, vector<32x128xf32>
    %cst_136 = arith.constant dense<0.000000e+00> : vector<16x128xf32>
    %287 = tpu.matmul %285, %286, %cst_136 {dimension_numbers = #tpu.dot_dimension_numbers<[1], [0], [0], [1], [0, 0, 1, 1], [], []>} : vector<16x32xf32>, vector<32x128xf32>, vector<16x128xf32> -> vector<16x128xf32>
    %c0_137 = arith.constant 0 : index
    %c0_138 = arith.constant 0 : index
    %288 = vector.load %arg8[%c0_137, %c0_138] : memref<1x128xf32, #tpu.memory_space<vmem>>, vector<1x128xf32>
    %289 = vector.broadcast %288 : vector<1x128xf32> to vector<16x128xf32>
    %290 = arith.addf %287, %289 : vector<16x128xf32>
    %cst_139 = arith.constant 0.000000e+00 : f32
    %291 = vector.broadcast %cst_139 : f32 to vector<2x128xf32>
    %292 = vector.extract_strided_slice %290 {offsets = [0, 0], sizes = [2, 128], strides = [1, 1]} : vector<16x128xf32> to vector<2x128xf32>
    %293 = arith.addf %291, %292 : vector<2x128xf32>
    %cst_140 = arith.constant 1.000000e+00 : f32
    %294 = vector.broadcast %cst_140 : f32 to vector<2x128xf32>
    %295 = arith.mulf %293, %294 : vector<2x128xf32>
    %296 = math.floor %295 : vector<2x128xf32>
    %cst_141 = arith.constant 0.000000e+00 : f32
    %297 = vector.broadcast %cst_141 : f32 to vector<2x128xf32>
    %298 = arith.maximumf %296, %297 : vector<2x128xf32>
    %c0_142 = arith.constant 0 : index
    %c0_143 = arith.constant 0 : index
    %299 = vector.load %arg9[%c0_142, %c0_143] : memref<16x128xf32, #tpu.memory_space<vmem>>, vector<2x128xf32>
    tpu.vector_store %arg9[%c0_142, %c0_143], %298 {strides = array<i32>} : memref<16x128xf32, #tpu.memory_space<vmem>>, vector<2x128xf32>,
    %cst_144 = arith.constant 1.000000e+00 : f32
    %300 = vector.broadcast %cst_144 : f32 to vector<2x128xf32>
    %301 = arith.mulf %298, %300 : vector<2x128xf32>
    %302 = arith.subf %293, %301 : vector<2x128xf32>
    %303 = vector.extract_strided_slice %290 {offsets = [2, 0], sizes = [2, 128], strides = [1, 1]} : vector<16x128xf32> to vector<2x128xf32>
    %304 = arith.addf %302, %303 : vector<2x128xf32>
    %cst_145 = arith.constant 1.000000e+00 : f32
    %305 = vector.broadcast %cst_145 : f32 to vector<2x128xf32>
    %306 = arith.mulf %304, %305 : vector<2x128xf32>
    %307 = math.floor %306 : vector<2x128xf32>
    %cst_146 = arith.constant 0.000000e+00 : f32
    %308 = vector.broadcast %cst_146 : f32 to vector<2x128xf32>
    %309 = arith.maximumf %307, %308 : vector<2x128xf32>
    %c2_147 = arith.constant 2 : index
    %c0_148 = arith.constant 0 : index
    %310 = vector.load %arg9[%c2_147, %c0_148] : memref<16x128xf32, #tpu.memory_space<vmem>>, vector<2x128xf32>
    tpu.vector_store %arg9[%c2_147, %c0_148], %309 {strides = array<i32>} : memref<16x128xf32, #tpu.memory_space<vmem>>, vector<2x128xf32>,
    %cst_149 = arith.constant 1.000000e+00 : f32
    %311 = vector.broadcast %cst_149 : f32 to vector<2x128xf32>
    %312 = arith.mulf %309, %311 : vector<2x128xf32>
    %313 = arith.subf %304, %312 : vector<2x128xf32>
    %314 = vector.extract_strided_slice %290 {offsets = [4, 0], sizes = [2, 128], strides = [1, 1]} : vector<16x128xf32> to vector<2x128xf32>
    %315 = arith.addf %313, %314 : vector<2x128xf32>
    %cst_150 = arith.constant 1.000000e+00 : f32
    %316 = vector.broadcast %cst_150 : f32 to vector<2x128xf32>
    %317 = arith.mulf %315, %316 : vector<2x128xf32>
    %318 = math.floor %317 : vector<2x128xf32>
    %cst_151 = arith.constant 0.000000e+00 : f32
    %319 = vector.broadcast %cst_151 : f32 to vector<2x128xf32>
    %320 = arith.maximumf %318, %319 : vector<2x128xf32>
    %c4_152 = arith.constant 4 : index
    %c0_153 = arith.constant 0 : index
    %321 = vector.load %arg9[%c4_152, %c0_153] : memref<16x128xf32, #tpu.memory_space<vmem>>, vector<2x128xf32>
    tpu.vector_store %arg9[%c4_152, %c0_153], %320 {strides = array<i32>} : memref<16x128xf32, #tpu.memory_space<vmem>>, vector<2x128xf32>,
    %cst_154 = arith.constant 1.000000e+00 : f32
    %322 = vector.broadcast %cst_154 : f32 to vector<2x128xf32>
    %323 = arith.mulf %320, %322 : vector<2x128xf32>
    %324 = arith.subf %315, %323 : vector<2x128xf32>
    %325 = vector.extract_strided_slice %290 {offsets = [6, 0], sizes = [2, 128], strides = [1, 1]} : vector<16x128xf32> to vector<2x128xf32>
    %326 = arith.addf %324, %325 : vector<2x128xf32>
    %cst_155 = arith.constant 1.000000e+00 : f32
    %327 = vector.broadcast %cst_155 : f32 to vector<2x128xf32>
    %328 = arith.mulf %326, %327 : vector<2x128xf32>
    %329 = math.floor %328 : vector<2x128xf32>
    %cst_156 = arith.constant 0.000000e+00 : f32
    %330 = vector.broadcast %cst_156 : f32 to vector<2x128xf32>
    %331 = arith.maximumf %329, %330 : vector<2x128xf32>
    %c6_157 = arith.constant 6 : index
    %c0_158 = arith.constant 0 : index
    %332 = vector.load %arg9[%c6_157, %c0_158] : memref<16x128xf32, #tpu.memory_space<vmem>>, vector<2x128xf32>
    tpu.vector_store %arg9[%c6_157, %c0_158], %331 {strides = array<i32>} : memref<16x128xf32, #tpu.memory_space<vmem>>, vector<2x128xf32>,
    %cst_159 = arith.constant 1.000000e+00 : f32
    %333 = vector.broadcast %cst_159 : f32 to vector<2x128xf32>
    %334 = arith.mulf %331, %333 : vector<2x128xf32>
    %335 = arith.subf %326, %334 : vector<2x128xf32>
    %336 = vector.extract_strided_slice %290 {offsets = [8, 0], sizes = [2, 128], strides = [1, 1]} : vector<16x128xf32> to vector<2x128xf32>
    %337 = arith.addf %335, %336 : vector<2x128xf32>
    %cst_160 = arith.constant 1.000000e+00 : f32
    %338 = vector.broadcast %cst_160 : f32 to vector<2x128xf32>
    %339 = arith.mulf %337, %338 : vector<2x128xf32>
    %340 = math.floor %339 : vector<2x128xf32>
    %cst_161 = arith.constant 0.000000e+00 : f32
    %341 = vector.broadcast %cst_161 : f32 to vector<2x128xf32>
    %342 = arith.maximumf %340, %341 : vector<2x128xf32>
    %c8_162 = arith.constant 8 : index
    %c0_163 = arith.constant 0 : index
    %343 = vector.load %arg9[%c8_162, %c0_163] : memref<16x128xf32, #tpu.memory_space<vmem>>, vector<2x128xf32>
    tpu.vector_store %arg9[%c8_162, %c0_163], %342 {strides = array<i32>} : memref<16x128xf32, #tpu.memory_space<vmem>>, vector<2x128xf32>,
    %cst_164 = arith.constant 1.000000e+00 : f32
    %344 = vector.broadcast %cst_164 : f32 to vector<2x128xf32>
    %345 = arith.mulf %342, %344 : vector<2x128xf32>
    %346 = arith.subf %337, %345 : vector<2x128xf32>
    %347 = vector.extract_strided_slice %290 {offsets = [10, 0], sizes = [2, 128], strides = [1, 1]} : vector<16x128xf32> to vector<2x128xf32>
    %348 = arith.addf %346, %347 : vector<2x128xf32>
    %cst_165 = arith.constant 1.000000e+00 : f32
    %349 = vector.broadcast %cst_165 : f32 to vector<2x128xf32>
    %350 = arith.mulf %348, %349 : vector<2x128xf32>
    %351 = math.floor %350 : vector<2x128xf32>
    %cst_166 = arith.constant 0.000000e+00 : f32
    %352 = vector.broadcast %cst_166 : f32 to vector<2x128xf32>
    %353 = arith.maximumf %351, %352 : vector<2x128xf32>
    %c10_167 = arith.constant 10 : index
    %c0_168 = arith.constant 0 : index
    %354 = vector.load %arg9[%c10_167, %c0_168] : memref<16x128xf32, #tpu.memory_space<vmem>>, vector<2x128xf32>
    tpu.vector_store %arg9[%c10_167, %c0_168], %353 {strides = array<i32>} : memref<16x128xf32, #tpu.memory_space<vmem>>, vector<2x128xf32>,
    %cst_169 = arith.constant 1.000000e+00 : f32
    %355 = vector.broadcast %cst_169 : f32 to vector<2x128xf32>
    %356 = arith.mulf %353, %355 : vector<2x128xf32>
    %357 = arith.subf %348, %356 : vector<2x128xf32>
    %358 = vector.extract_strided_slice %290 {offsets = [12, 0], sizes = [2, 128], strides = [1, 1]} : vector<16x128xf32> to vector<2x128xf32>
    %359 = arith.addf %357, %358 : vector<2x128xf32>
    %cst_170 = arith.constant 1.000000e+00 : f32
    %360 = vector.broadcast %cst_170 : f32 to vector<2x128xf32>
    %361 = arith.mulf %359, %360 : vector<2x128xf32>
    %362 = math.floor %361 : vector<2x128xf32>
    %cst_171 = arith.constant 0.000000e+00 : f32
    %363 = vector.broadcast %cst_171 : f32 to vector<2x128xf32>
    %364 = arith.maximumf %362, %363 : vector<2x128xf32>
    %c12_172 = arith.constant 12 : index
    %c0_173 = arith.constant 0 : index
    %365 = vector.load %arg9[%c12_172, %c0_173] : memref<16x128xf32, #tpu.memory_space<vmem>>, vector<2x128xf32>
    tpu.vector_store %arg9[%c12_172, %c0_173], %364 {strides = array<i32>} : memref<16x128xf32, #tpu.memory_space<vmem>>, vector<2x128xf32>,
    %cst_174 = arith.constant 1.000000e+00 : f32
    %366 = vector.broadcast %cst_174 : f32 to vector<2x128xf32>
    %367 = arith.mulf %364, %366 : vector<2x128xf32>
    %368 = arith.subf %359, %367 : vector<2x128xf32>
    %369 = vector.extract_strided_slice %290 {offsets = [14, 0], sizes = [2, 128], strides = [1, 1]} : vector<16x128xf32> to vector<2x128xf32>
    %370 = arith.addf %368, %369 : vector<2x128xf32>
    %cst_175 = arith.constant 1.000000e+00 : f32
    %371 = vector.broadcast %cst_175 : f32 to vector<2x128xf32>
    %372 = arith.mulf %370, %371 : vector<2x128xf32>
    %373 = math.floor %372 : vector<2x128xf32>
    %cst_176 = arith.constant 0.000000e+00 : f32
    %374 = vector.broadcast %cst_176 : f32 to vector<2x128xf32>
    %375 = arith.maximumf %373, %374 : vector<2x128xf32>
    %c14_177 = arith.constant 14 : index
    %c0_178 = arith.constant 0 : index
    %376 = vector.load %arg9[%c14_177, %c0_178] : memref<16x128xf32, #tpu.memory_space<vmem>>, vector<2x128xf32>
    tpu.vector_store %arg9[%c14_177, %c0_178], %375 {strides = array<i32>} : memref<16x128xf32, #tpu.memory_space<vmem>>, vector<2x128xf32>,
    return
  }
}

</mosaic_0001>

<llo_original>
// kernel: tpu_custom_call.1
$region0: #{tpu_custom_call.1}
  #allocation0 [shape = 'u32[]', space=smem, size = 0x4, offset = 0x4, fixed_abs, tag = 'smem constant byte address 0x4 - core index']
  #allocation1 [shape = 'u32[144,128]{1,0:T(1,128)}', space=vmem, size = 0x12000, scoped, tag = 'internal scratch']
  #allocation2 [shape = 'f32[16,32]{1,0:T(8,128)}', space=vmem, size = 0x2000, scoped, tag = 'scratch operand']
  %s0 = inlined_call_operand.vmem [shape: f32[16,2], index: 0, kind: input, shape index: {}]
  %s1 = inlined_call_operand.vmem [shape: f32[2,32], index: 1, kind: input, shape index: {}]
  %s2 = inlined_call_operand.vmem [shape: f32[1,32], index: 2, kind: input, shape index: {}]
  %s3 = inlined_call_operand.hbm [shape: f32[32,32], index: 3, kind: input, shape index: {}]
  %s4 = inlined_call_operand.vmem [shape: f32[1,32], index: 4, kind: input, shape index: {}]
  %s5 = inlined_call_operand.vmem [shape: f32[32,32], index: 5, kind: input, shape index: {}]
  %s6 = inlined_call_operand.vmem [shape: f32[1,32], index: 6, kind: input, shape index: {}]
  %s7 = inlined_call_operand.hbm [shape: f32[32,128], index: 7, kind: input, shape index: {}]
  %s8 = inlined_call_operand.vmem [shape: f32[1,128], index: 8, kind: input, shape index: {}]
  %s9 = inlined_call_operand.hbm [shape: f32[16,128], index: 9, kind: output, shape index: {}]
  %s10 = sld [smem:[#allocation0]]
  $region54: #{tpu_custom_call.1} parent=0
    _
  %s12 = ssub.s32 1, %s10
  %s13 = scalar_select 0, %s12, %s10
  $region1: #{tpu_custom_call.1} parent=0
    #allocation3 [shape = 'u8[16384]{0}', space=vmem, size = 0x4000, scoped, tag = 'input window, operand 3, single buffered']
    #allocation4 [shape = 's32[1]{0}', space=sflag, size = 0x4, scoped, tag = 'scoped memory for tpu_custom_call.1']
    #allocation5 [shape = 's32[1]{0}', space=sflag, size = 0x4, scoped, tag = 'scoped memory for tpu_custom_call.1']
    #allocation6 [shape = 'u8[16384]{0}', space=vmem, size = 0x4000, scoped, tag = 'input window, operand 7, single buffered']
    #allocation7 [shape = 's32[1]{0}', space=sflag, size = 0x4, scoped, tag = 'scoped memory for tpu_custom_call.1']
    #allocation8 [shape = 'u8[8192]{0}', space=vmem, size = 0x2000, scoped, tag = 'output window, operand 0, single buffered']
    %14 = vsyncpa [#allocation4], 0
    %15 = vsyncpa [#allocation7], 0
    %16 = vsyncpa [#allocation5], 0
    // Predicated region
    $region2: #{tpu_custom_call.1} parent=1 // pred_check
      _
    $region3: #{tpu_custom_call.1} parent=1 // pred_check_branch
      %18 = sbr.rel (0) target = $region5
    $region4: #{tpu_custom_call.1} parent=1 // pred_region
      _
    $region5: #{tpu_custom_call.1} parent=1 // pred_fallthru
      _
    // Predicated region
    $region6: #{tpu_custom_call.1} parent=1 // pred_check
      _
    $region7: #{tpu_custom_call.1} parent=1 // pred_check_branch
      %20 = sbr.rel (0) target = $region9
    $region8: #{tpu_custom_call.1} parent=1 // pred_region
      _
    $region9: #{tpu_custom_call.1} parent=1 // pred_fallthru
      _
    // Predicated region
    $region10: #{tpu_custom_call.1} parent=1 // pred_check
      _
    $region11: #{tpu_custom_call.1} parent=1 // pred_check_branch
      %22 = sbr.rel (0) target = $region13
    $region12: #{tpu_custom_call.1} parent=1 // pred_region
      _
    $region13: #{tpu_custom_call.1} parent=1 // pred_fallthru
      _
    // Predicated region
    $region14: #{tpu_custom_call.1} parent=1 // pred_check
      _
    $region15: #{tpu_custom_call.1} parent=1 // pred_check_branch
      %24 = sbr.rel (0) target = $region17
    $region16: #{tpu_custom_call.1} parent=1 // pred_region
      %s26 = ssub.s32 512, 512
      %27 = vsyncadd [#allocation4], %s26
      %s28 = sshll.u32 [#allocation3], 4
      %s29 = int_to_ptr.vmem [resolvable:$true] %s28
      %34 = dma.hbm_to_vmem [thread:$0]  %s3, 512, %s29, [#allocation4], 128, 128, 8
    $region17: #{tpu_custom_call.1} parent=1 // pred_fallthru
      _
    // Predicated region
    $region18: #{tpu_custom_call.1} parent=1 // pred_check
      _
    $region19: #{tpu_custom_call.1} parent=1 // pred_check_branch
      %36 = sbr.rel (0) target = $region21
    $region20: #{tpu_custom_call.1} parent=1 // pred_region
      _
    $region21: #{tpu_custom_call.1} parent=1 // pred_fallthru
      _
    // Predicated region
    $region22: #{tpu_custom_call.1} parent=1 // pred_check
      _
    $region23: #{tpu_custom_call.1} parent=1 // pred_check_branch
      %38 = sbr.rel (0) target = $region25
    $region24: #{tpu_custom_call.1} parent=1 // pred_region
      _
    $region25: #{tpu_custom_call.1} parent=1 // pred_fallthru
      _
    // Predicated region
    $region26: #{tpu_custom_call.1} parent=1 // pred_check
      _
    $region27: #{tpu_custom_call.1} parent=1 // pred_check_branch
      %40 = sbr.rel (0) target = $region29
    $region28: #{tpu_custom_call.1} parent=1 // pred_region
      _
    $region29: #{tpu_custom_call.1} parent=1 // pred_fallthru
      _
    // Predicated region
    $region30: #{tpu_custom_call.1} parent=1 // pred_check
      _
    $region31: #{tpu_custom_call.1} parent=1 // pred_check_branch
      %42 = sbr.rel (0) target = $region33
    $region32: #{tpu_custom_call.1} parent=1 // pred_region
      %s44 = ssub.s32 512, 512
      %45 = vsyncadd [#allocation7], %s44
      %s46 = sshll.u32 [#allocation6], 4
      %s47 = int_to_ptr.vmem [resolvable:$true] %s46
      %52 = dma.hbm_to_vmem [thread:$0]  %s7, 512, %s47, [#allocation7], 128, 128, 8
    $region33: #{tpu_custom_call.1} parent=1 // pred_fallthru
      _
    // Predicated region
    $region34: #{tpu_custom_call.1} parent=1 // pred_check
      _
    $region35: #{tpu_custom_call.1} parent=1 // pred_check_branch
      %54 = sbr.rel (0) target = $region37
    $region36: #{tpu_custom_call.1} parent=1 // pred_region
      _
    $region37: #{tpu_custom_call.1} parent=1 // pred_fallthru
      _
    // Predicated region
    $region38: #{tpu_custom_call.1} parent=1 // pred_check
      _
    $region39: #{tpu_custom_call.1} parent=1 // pred_check_branch
      %56 = sbr.rel (0) target = $region41
    $region40: #{tpu_custom_call.1} parent=1 // pred_region
      %57 = dma.done [#allocation4], 512
    $region41: #{tpu_custom_call.1} parent=1 // pred_fallthru
      _
    // Predicated region
    $region42: #{tpu_custom_call.1} parent=1 // pred_check
      _
    $region43: #{tpu_custom_call.1} parent=1 // pred_check_branch
      %59 = sbr.rel (0) target = $region45
    $region44: #{tpu_custom_call.1} parent=1 // pred_region
      %60 = dma.done [#allocation7], 512
    $region45: #{tpu_custom_call.1} parent=1 // pred_fallthru
      _
    %v61 = vld [vmem:[%s0] sm:$0xff]
    %v62 = vld [vmem:[%s0 + $0x8] sm:$0xff]
    %v63 = vld [vmem:[%s1] sm:$0x1]
    %65 = vset.pattern.permute.xlu0 0
    %66 = vperm.xlu0 %65, %v61
    %v67 = vpop.permute.xlu0 %66
    %70 = vset.pattern.permute.xlu0 0
    %71 = vperm.xlu0 %70, %v62
    %v72 = vpop.permute.xlu0 %71
    %v74 = vlaneseq
    %v75 = vshrl.u32 %v74, 7
    %v76 = vsub.s32 0, %v75
    %v77 = vrot.slane %v63, %v76
    %v78 = vmul.f32 %v67, %v77
    %v79 = vmul.f32 %v72, %v77
    %v80 = vld [vmem:[%s1 + $0x1] sm:$0x1]
    %81 = vset.pattern.permute.xlu0 1
    %82 = vperm.xlu0 %81, %v61
    %v83 = vpop.permute.xlu0 %82
    %85 = vset.pattern.permute.xlu0 1
    %86 = vperm.xlu0 %85, %v62
    %v87 = vpop.permute.xlu0 %86
    %v89 = vlaneseq
    %v90 = vshrl.u32 %v89, 7
    %v91 = vsub.s32 0, %v90
    %v92 = vrot.slane %v80, %v91
    %v93 = vmul.f32 %v83, %v92
    %v94 = vmul.f32 %v87, %v92
    %v95 = vadd.f32 %v78, %v93
    %v96 = vadd.f32 %v79, %v94
    %v97 = vld [vmem:[%s2] sm:$0x1]
    %v99 = vlaneseq
    %v100 = vshrl.u32 %v99, 7
    %v101 = vsub.s32 0, %v100
    %v102 = vrot.slane %v97, %v101
    %v104 = vadd.f32 %v95, %v102
    %v105 = vadd.f32 %v96, %v102
    %v106 = vadd.f32 %v104, 0.0
    %v107 = vfloor.f32 %v106
    %v108 = vmax.f32 %v107, 0.0
    %vm109 = vcmask 254976
    %110 = vst.msk [vmem:[#allocation2] sm:$0x3] %vm109, %v108
    %v111 = vsub.f32 %v106, %v108
    %v113 = vrot.slane %v104, 2
    %v115 = vadd.f32 %v111, %v113
    %v116 = vfloor.f32 %v115
    %v117 = vmax.f32 %v116, 0.0
    %118 = vst.msk [vmem:[#allocation2 + $0x2] sm:$0x3] %vm109, %v117
    %v119 = vsub.f32 %v115, %v117
    %v120 = vrot.slane %v104, 4
    %v122 = vadd.f32 %v119, %v120
    %v123 = vfloor.f32 %v122
    %v124 = vmax.f32 %v123, 0.0
    %125 = vst.msk [vmem:[#allocation2 + $0x4] sm:$0x3] %vm109, %v124
    %v126 = vsub.f32 %v122, %v124
    %v127 = vrot.slane %v104, 6
    %v129 = vadd.f32 %v126, %v127
    %v130 = vfloor.f32 %v129
    %v131 = vmax.f32 %v130, 0.0
    %132 = vst.msk [vmem:[#allocation2 + $0x6] sm:$0x3] %vm109, %v131
    %v133 = vsub.f32 %v129, %v131
    %v134 = vadd.f32 %v133, %v105
    %v135 = vfloor.f32 %v134
    %v136 = vmax.f32 %v135, 0.0
    %137 = vst.msk [vmem:[#allocation2 + $0x8] sm:$0x3] %vm109, %v136
    %v138 = vsub.f32 %v134, %v136
    %v140 = vrot.slane %v105, 2
    %v142 = vadd.f32 %v138, %v140
    %v143 = vfloor.f32 %v142
    %v144 = vmax.f32 %v143, 0.0
    %145 = vst.msk [vmem:[#allocation2 + $0xa] sm:$0x3] %vm109, %v144
    %v146 = vsub.f32 %v142, %v144
    %v147 = vrot.slane %v105, 4
    %v149 = vadd.f32 %v146, %v147
    %v150 = vfloor.f32 %v149
    %v151 = vmax.f32 %v150, 0.0
    %152 = vst.msk [vmem:[#allocation2 + $0xc] sm:$0x3] %vm109, %v151
    %v153 = vsub.f32 %v149, %v151
    %v154 = vrot.slane %v105, 6
    %v156 = vadd.f32 %v153, %v154
    %v157 = vfloor.f32 %v156
    %v158 = vmax.f32 %v157, 0.0
    %159 = vst.msk [vmem:[#allocation2 + $0xe] sm:$0x3] %vm109, %v158
    %v160 = vld [vmem:[#allocation2] sm:$0xff]
    %v161 = vld [vmem:[#allocation2 + $0x8] sm:$0xff]
    %v162 = vld [vmem:[#allocation3] sm:$0xff]
    %v163 = vld [vmem:[#allocation3 + $0x8] sm:$0xff]
    %v164 = vld [vmem:[#allocation3 + $0x10] sm:$0xff]
    %v165 = vld [vmem:[#allocation3 + $0x18] sm:$0xff]
    %v166 = vld [vmem:[%s4] sm:$0x1]
    %v168 = vlaneseq
    %v169 = vshrl.u32 %v168, 7
    %v170 = vsub.s32 0, %v169
    %v171 = vrot.slane %v166, %v170
    %vm173 = vcmask 261120
    %v175 = vsel %vm173, %v160, 0
    %v178 = vsel %vm173, %v161, 0
    %180 = vmatprep.subr.mxu0 0.0
    %181 = vmatpush1.msra.mxu0 %v162
    %182 = vmatprep.subr.mxu0 0.0
    %183 = vmatpush1.msra.mxu0 %v163
    %184 = vmatprep.subr.mxu0 0.0
    %185 = vmatpush1.msra.mxu0 %v164
    %186 = vmatprep.subr.mxu0 0.0
    %187 = vmatpush1.msra.mxu0 %v165
    %188 = vmatprep.subr.mxu0 0.0
    %189 = vmatpush1.msra.mxu0 0.0
    %190 = vmatprep.subr.mxu0 0.0
    %191 = vmatpush1.msra.mxu0 0.0
    %192 = vmatprep.subr.mxu0 0.0
    %193 = vmatpush1.msra.mxu0 0.0
    %194 = vmatprep.subr.mxu0 0.0
    %195 = vmatpush1.msra.mxu0 0.0
    %196 = vmatprep.subr.mxu0 0.0
    %197 = vmatpush1.msra.mxu0 0.0
    %198 = vmatprep.subr.mxu0 0.0
    %199 = vmatpush1.msra.mxu0 0.0
    %200 = vmatprep.subr.mxu0 0.0
    %201 = vmatpush1.msra.mxu0 0.0
    %202 = vmatprep.subr.mxu0 0.0
    %203 = vmatpush1.msra.mxu0 0.0
    %204 = vmatprep.subr.mxu0 0.0
    %205 = vmatpush1.msra.mxu0 0.0
    %206 = vmatprep.subr.mxu0 0.0
    %207 = vmatpush1.msra.mxu0 0.0
    %208 = vmatprep.subr.mxu0 0.0
    %209 = vmatpush1.msra.mxu0 0.0
    %210 = vmatprep.subr.mxu0 0.0
    %211 = vmatpush1.msra.mxu0 0.0
    %212 = vmatprep.subr.mxu0 0.0
    %213 = vmatpush1.msra.mxu0 0.0
    %214 = vmatprep.subr.mxu0 0.0
    %215 = vmatpush1.msra.mxu0 0.0
    %216 = vmatprep.subr.mxu0 0.0
    %217 = vmatpush1.msra.mxu0 0.0
    %218 = vmatprep.subr.mxu0 0.0
    %219 = vmatpush1.msra.mxu0 0.0
    %220 = vmatprep.subr.mxu0 0.0
    %221 = vmatpush1.msra.mxu0 0.0
    %222 = vmatprep.subr.mxu0 0.0
    %223 = vmatpush1.msra.mxu0 0.0
    %224 = vmatprep.subr.mxu0 0.0
    %225 = vmatpush1.msra.mxu0 0.0
    %226 = vmatprep.subr.mxu0 0.0
    %227 = vmatpush1.msra.mxu0 0.0
    %228 = vmatprep.subr.mxu0 0.0
    %229 = vmatpush1.msra.mxu0 0.0
    %230 = vmatprep.subr.mxu0 0.0
    %231 = vmatpush1.msra.mxu0 0.0
    %232 = vmatprep.subr.mxu0 0.0
    %233 = vmatpush1.msra.mxu0 0.0
    %234 = vmatprep.subr.mxu0 0.0
    %235 = vmatpush1.msra.mxu0 0.0
    %236 = vmatprep.subr.mxu0 0.0
    %237 = vmatpush1.msra.mxu0 0.0
    %238 = vmatprep.subr.mxu0 0.0
    %239 = vmatpush1.msra.mxu0 0.0
    %240 = vmatprep.subr.mxu0 0.0
    %241 = vmatpush1.msra.mxu0 0.0
    %242 = vmatprep.subr.mxu0 0.0
    %243 = vmatpush1.msra.mxu0 0.0
    %244 = vmatprep.mubr.f32.mxu0 0.0
    %245 = vmatmul.mubr.f32.gmra.mrb[0].mxu0 %v175
    %v246 = vpop.f32.mrb[0].mxu0
    %v247 = vadd.f32 %v171, %v246
    %v248 = vpop.f32.mrb[0].mxu0
    %249 = vmatprep.mubr.f32.mxu0 0.0
    %250 = vmatmul.mubr.f32.gmra.mrb[0].mxu0 %v178
    %v251 = vpop.f32.mrb[0].mxu0
    %v252 = vadd.f32 %v171, %v251
    %v253 = vpop.f32.mrb[0].mxu0
    %254 = vdwg.mxu0
    %v255 = vadd.f32 %v247, 0.0
    %v256 = vfloor.f32 %v255
    %v257 = vmax.f32 %v256, 0.0
    %258 = vst.msk [vmem:[#allocation2] sm:$0x3] %vm109, %v257
    %v259 = vsub.f32 %v255, %v257
    %v261 = vrot.slane %v247, 2
    %v263 = vadd.f32 %v259, %v261
    %v264 = vfloor.f32 %v263
    %v265 = vmax.f32 %v264, 0.0
    %266 = vst.msk [vmem:[#allocation2 + $0x2] sm:$0x3] %vm109, %v265
    %v267 = vsub.f32 %v263, %v265
    %v268 = vrot.slane %v247, 4
    %v270 = vadd.f32 %v267, %v268
    %v271 = vfloor.f32 %v270
    %v272 = vmax.f32 %v271, 0.0
    %273 = vst.msk [vmem:[#allocation2 + $0x4] sm:$0x3] %vm109, %v272
    %v274 = vsub.f32 %v270, %v272
    %v275 = vrot.slane %v247, 6
    %v277 = vadd.f32 %v274, %v275
    %v278 = vfloor.f32 %v277
    %v279 = vmax.f32 %v278, 0.0
    %280 = vst.msk [vmem:[#allocation2 + $0x6] sm:$0x3] %vm109, %v279
    %v281 = vsub.f32 %v277, %v279
    %v282 = vadd.f32 %v281, %v252
    %v283 = vfloor.f32 %v282
    %v284 = vmax.f32 %v283, 0.0
    %285 = vst.msk [vmem:[#allocation2 + $0x8] sm:$0x3] %vm109, %v284
    %v286 = vsub.f32 %v282, %v284
    %v288 = vrot.slane %v252, 2
    %v290 = vadd.f32 %v286, %v288
    %v291 = vfloor.f32 %v290
    %v292 = vmax.f32 %v291, 0.0
    %293 = vst.msk [vmem:[#allocation2 + $0xa] sm:$0x3] %vm109, %v292
    %v294 = vsub.f32 %v290, %v292
    %v295 = vrot.slane %v252, 4
    %v297 = vadd.f32 %v294, %v295
    %v298 = vfloor.f32 %v297
    %v299 = vmax.f32 %v298, 0.0
    %300 = vst.msk [vmem:[#allocation2 + $0xc] sm:$0x3] %vm109, %v299
    %v301 = vsub.f32 %v297, %v299
    %v302 = vrot.slane %v252, 6
    %v304 = vadd.f32 %v301, %v302
    %v305 = vfloor.f32 %v304
    %v306 = vmax.f32 %v305, 0.0
    %307 = vst.msk [vmem:[#allocation2 + $0xe] sm:$0x3] %vm109, %v306
    %v308 = vld [vmem:[#allocation2] sm:$0xff]
    %v309 = vld [vmem:[#allocation2 + $0x8] sm:$0xff]
    %v310 = vld [vmem:[%s5] sm:$0xff]
    %v311 = vld [vmem:[%s5 + $0x8] sm:$0xff]
    %v312 = vld [vmem:[%s5 + $0x10] sm:$0xff]
    %v313 = vld [vmem:[%s5 + $0x18] sm:$0xff]
    %v314 = vld [vmem:[%s6] sm:$0x1]
    %v316 = vlaneseq
    %v317 = vshrl.u32 %v316, 7
    %v318 = vsub.s32 0, %v317
    %v319 = vrot.slane %v314, %v318
    %v322 = vsel %vm173, %v308, 0
    %v325 = vsel %vm173, %v309, 0
    %327 = vmatprep.subr.mxu0 0.0
    %328 = vmatpush1.msra.mxu0 %v310
    %329 = vmatprep.subr.mxu0 0.0
    %330 = vmatpush1.msra.mxu0 %v311
    %331 = vmatprep.subr.mxu0 0.0
    %332 = vmatpush1.msra.mxu0 %v312
    %333 = vmatprep.subr.mxu0 0.0
    %334 = vmatpush1.msra.mxu0 %v313
    %335 = vmatprep.subr.mxu0 0.0
    %336 = vmatpush1.msra.mxu0 0.0
    %337 = vmatprep.subr.mxu0 0.0
    %338 = vmatpush1.msra.mxu0 0.0
    %339 = vmatprep.subr.mxu0 0.0
    %340 = vmatpush1.msra.mxu0 0.0
    %341 = vmatprep.subr.mxu0 0.0
    %342 = vmatpush1.msra.mxu0 0.0
    %343 = vmatprep.subr.mxu0 0.0
    %344 = vmatpush1.msra.mxu0 0.0
    %345 = vmatprep.subr.mxu0 0.0
    %346 = vmatpush1.msra.mxu0 0.0
    %347 = vmatprep.subr.mxu0 0.0
    %348 = vmatpush1.msra.mxu0 0.0
    %349 = vmatprep.subr.mxu0 0.0
    %350 = vmatpush1.msra.mxu0 0.0
    %351 = vmatprep.subr.mxu0 0.0
    %352 = vmatpush1.msra.mxu0 0.0
    %353 = vmatprep.subr.mxu0 0.0
    %354 = vmatpush1.msra.mxu0 0.0
    %355 = vmatprep.subr.mxu0 0.0
    %356 = vmatpush1.msra.mxu0 0.0
    %357 = vmatprep.subr.mxu0 0.0
    %358 = vmatpush1.msra.mxu0 0.0
    %359 = vmatprep.subr.mxu0 0.0
    %360 = vmatpush1.msra.mxu0 0.0
    %361 = vmatprep.subr.mxu0 0.0
    %362 = vmatpush1.msra.mxu0 0.0
    %363 = vmatprep.subr.mxu0 0.0
    %364 = vmatpush1.msra.mxu0 0.0
    %365 = vmatprep.subr.mxu0 0.0
    %366 = vmatpush1.msra.mxu0 0.0
    %367 = vmatprep.subr.mxu0 0.0
    %368 = vmatpush1.msra.mxu0 0.0
    %369 = vmatprep.subr.mxu0 0.0
    %370 = vmatpush1.msra.mxu0 0.0
    %371 = vmatprep.subr.mxu0 0.0
    %372 = vmatpush1.msra.mxu0 0.0
    %373 = vmatprep.subr.mxu0 0.0
    %374 = vmatpush1.msra.mxu0 0.0
    %375 = vmatprep.subr.mxu0 0.0
    %376 = vmatpush1.msra.mxu0 0.0
    %377 = vmatprep.subr.mxu0 0.0
    %378 = vmatpush1.msra.mxu0 0.0
    %379 = vmatprep.subr.mxu0 0.0
    %380 = vmatpush1.msra.mxu0 0.0
    %381 = vmatprep.subr.mxu0 0.0
    %382 = vmatpush1.msra.mxu0 0.0
    %383 = vmatprep.subr.mxu0 0.0
    %384 = vmatpush1.msra.mxu0 0.0
    %385 = vmatprep.subr.mxu0 0.0
    %386 = vmatpush1.msra.mxu0 0.0
    %387 = vmatprep.subr.mxu0 0.0
    %388 = vmatpush1.msra.mxu0 0.0
    %389 = vmatprep.subr.mxu0 0.0
    %390 = vmatpush1.msra.mxu0 0.0
    %391 = vmatprep.mubr.f32.mxu0 0.0
    %392 = vmatmul.mubr.f32.gmra.mrb[0].mxu0 %v322
    %v393 = vpop.f32.mrb[0].mxu0
    %v394 = vadd.f32 %v319, %v393
    %v395 = vpop.f32.mrb[0].mxu0
    %396 = vmatprep.mubr.f32.mxu0 0.0
    %397 = vmatmul.mubr.f32.gmra.mrb[0].mxu0 %v325
    %v398 = vpop.f32.mrb[0].mxu0
    %v399 = vadd.f32 %v319, %v398
    %v400 = vpop.f32.mrb[0].mxu0
    %401 = vdwg.mxu0
    %v402 = vadd.f32 %v394, 0.0
    %v403 = vfloor.f32 %v402
    %v404 = vmax.f32 %v403, 0.0
    %405 = vst.msk [vmem:[#allocation2] sm:$0x3] %vm109, %v404
    %v406 = vsub.f32 %v402, %v404
    %v408 = vrot.slane %v394, 2
    %v410 = vadd.f32 %v406, %v408
    %v411 = vfloor.f32 %v410
    %v412 = vmax.f32 %v411, 0.0
    %413 = vst.msk [vmem:[#allocation2 + $0x2] sm:$0x3] %vm109, %v412
    %v414 = vsub.f32 %v410, %v412
    %v415 = vrot.slane %v394, 4
    %v417 = vadd.f32 %v414, %v415
    %v418 = vfloor.f32 %v417
    %v419 = vmax.f32 %v418, 0.0
    %420 = vst.msk [vmem:[#allocation2 + $0x4] sm:$0x3] %vm109, %v419
    %v421 = vsub.f32 %v417, %v419
    %v422 = vrot.slane %v394, 6
    %v424 = vadd.f32 %v421, %v422
    %v425 = vfloor.f32 %v424
    %v426 = vmax.f32 %v425, 0.0
    %427 = vst.msk [vmem:[#allocation2 + $0x6] sm:$0x3] %vm109, %v426
    %v428 = vsub.f32 %v424, %v426
    %v429 = vadd.f32 %v428, %v399
    %v430 = vfloor.f32 %v429
    %v431 = vmax.f32 %v430, 0.0
    %432 = vst.msk [vmem:[#allocation2 + $0x8] sm:$0x3] %vm109, %v431
    %v433 = vsub.f32 %v429, %v431
    %v435 = vrot.slane %v399, 2
    %v437 = vadd.f32 %v433, %v435
    %v438 = vfloor.f32 %v437
    %v439 = vmax.f32 %v438, 0.0
    %440 = vst.msk [vmem:[#allocation2 + $0xa] sm:$0x3] %vm109, %v439
    %v441 = vsub.f32 %v437, %v439
    %v442 = vrot.slane %v399, 4
    %v444 = vadd.f32 %v441, %v442
    %v445 = vfloor.f32 %v444
    %v446 = vmax.f32 %v445, 0.0
    %447 = vst.msk [vmem:[#allocation2 + $0xc] sm:$0x3] %vm109, %v446
    %v448 = vsub.f32 %v444, %v446
    %v449 = vrot.slane %v399, 6
    %v451 = vadd.f32 %v448, %v449
    %v452 = vfloor.f32 %v451
    %v453 = vmax.f32 %v452, 0.0
    %454 = vst.msk [vmem:[#allocation2 + $0xe] sm:$0x3] %vm109, %v453
    %v455 = vld [vmem:[#allocation2] sm:$0xff]
    %v456 = vld [vmem:[#allocation2 + $0x8] sm:$0xff]
    %v457 = vld [vmem:[#allocation6] sm:$0xff]
    %v458 = vld [vmem:[#allocation6 + $0x8] sm:$0xff]
    %v459 = vld [vmem:[#allocation6 + $0x10] sm:$0xff]
    %v460 = vld [vmem:[#allocation6 + $0x18] sm:$0xff]
    %v461 = vld [vmem:[%s8] sm:$0x1]
    %v463 = vlaneseq
    %v464 = vshrl.u32 %v463, 7
    %v465 = vsub.s32 0, %v464
    %v466 = vrot.slane %v461, %v465
    %v469 = vsel %vm173, %v455, 0
    %v472 = vsel %vm173, %v456, 0
    %474 = vmatprep.subr.mxu0 0.0
    %475 = vmatpush1.msra.mxu0 %v457
    %476 = vmatprep.subr.mxu0 0.0
    %477 = vmatpush1.msra.mxu0 %v458
    %478 = vmatprep.subr.mxu0 0.0
    %479 = vmatpush1.msra.mxu0 %v459
    %480 = vmatprep.subr.mxu0 0.0
    %481 = vmatpush1.msra.mxu0 %v460
    %482 = vmatprep.subr.mxu0 0.0
    %483 = vmatpush1.msra.mxu0 0.0
    %484 = vmatprep.subr.mxu0 0.0
    %485 = vmatpush1.msra.mxu0 0.0
    %486 = vmatprep.subr.mxu0 0.0
    %487 = vmatpush1.msra.mxu0 0.0
    %488 = vmatprep.subr.mxu0 0.0
    %489 = vmatpush1.msra.mxu0 0.0
    %490 = vmatprep.subr.mxu0 0.0
    %491 = vmatpush1.msra.mxu0 0.0
    %492 = vmatprep.subr.mxu0 0.0
    %493 = vmatpush1.msra.mxu0 0.0
    %494 = vmatprep.subr.mxu0 0.0
    %495 = vmatpush1.msra.mxu0 0.0
    %496 = vmatprep.subr.mxu0 0.0
    %497 = vmatpush1.msra.mxu0 0.0
    %498 = vmatprep.subr.mxu0 0.0
    %499 = vmatpush1.msra.mxu0 0.0
    %500 = vmatprep.subr.mxu0 0.0
    %501 = vmatpush1.msra.mxu0 0.0
    %502 = vmatprep.subr.mxu0 0.0
    %503 = vmatpush1.msra.mxu0 0.0
    %504 = vmatprep.subr.mxu0 0.0
    %505 = vmatpush1.msra.mxu0 0.0
    %506 = vmatprep.subr.mxu0 0.0
    %507 = vmatpush1.msra.mxu0 0.0
    %508 = vmatprep.subr.mxu0 0.0
    %509 = vmatpush1.msra.mxu0 0.0
    %510 = vmatprep.subr.mxu0 0.0
    %511 = vmatpush1.msra.mxu0 0.0
    %512 = vmatprep.subr.mxu0 0.0
    %513 = vmatpush1.msra.mxu0 0.0
    %514 = vmatprep.subr.mxu0 0.0
    %515 = vmatpush1.msra.mxu0 0.0
    %516 = vmatprep.subr.mxu0 0.0
    %517 = vmatpush1.msra.mxu0 0.0
    %518 = vmatprep.subr.mxu0 0.0
    %519 = vmatpush1.msra.mxu0 0.0
    %520 = vmatprep.subr.mxu0 0.0
    %521 = vmatpush1.msra.mxu0 0.0
    %522 = vmatprep.subr.mxu0 0.0
    %523 = vmatpush1.msra.mxu0 0.0
    %524 = vmatprep.subr.mxu0 0.0
    %525 = vmatpush1.msra.mxu0 0.0
    %526 = vmatprep.subr.mxu0 0.0
    %527 = vmatpush1.msra.mxu0 0.0
    %528 = vmatprep.subr.mxu0 0.0
    %529 = vmatpush1.msra.mxu0 0.0
    %530 = vmatprep.subr.mxu0 0.0
    %531 = vmatpush1.msra.mxu0 0.0
    %532 = vmatprep.subr.mxu0 0.0
    %533 = vmatpush1.msra.mxu0 0.0
    %534 = vmatprep.subr.mxu0 0.0
    %535 = vmatpush1.msra.mxu0 0.0
    %536 = vmatprep.subr.mxu0 0.0
    %537 = vmatpush1.msra.mxu0 0.0
    %538 = vmatprep.mubr.f32.mxu0 0.0
    %539 = vmatmul.mubr.f32.gmra.mrb[0].mxu0 %v469
    %v540 = vpop.f32.mrb[0].mxu0
    %v541 = vadd.f32 %v466, %v540
    %v542 = vpop.f32.mrb[0].mxu0
    %543 = vmatprep.mubr.f32.mxu0 0.0
    %544 = vmatmul.mubr.f32.gmra.mrb[0].mxu0 %v472
    %v545 = vpop.f32.mrb[0].mxu0
    %v546 = vadd.f32 %v466, %v545
    %v547 = vpop.f32.mrb[0].mxu0
    %548 = vdwg.mxu0
    %v549 = vadd.f32 %v541, 0.0
    %v550 = vfloor.f32 %v549
    %v551 = vmax.f32 %v550, 0.0
    %552 = vst [vmem:[#allocation8] sm:$0x3] %v551
    %v553 = vsub.f32 %v549, %v551
    %v555 = vrot.slane %v541, 2
    %v557 = vadd.f32 %v553, %v555
    %v558 = vfloor.f32 %v557
    %v559 = vmax.f32 %v558, 0.0
    %560 = vst [vmem:[#allocation8 + $0x2] sm:$0x3] %v559
    %v561 = vsub.f32 %v557, %v559
    %v562 = vrot.slane %v541, 4
    %v564 = vadd.f32 %v561, %v562
    %v565 = vfloor.f32 %v564
    %v566 = vmax.f32 %v565, 0.0
    %567 = vst [vmem:[#allocation8 + $0x4] sm:$0x3] %v566
    %v568 = vsub.f32 %v564, %v566
    %v569 = vrot.slane %v541, 6
    %v571 = vadd.f32 %v568, %v569
    %v572 = vfloor.f32 %v571
    %v573 = vmax.f32 %v572, 0.0
    %574 = vst [vmem:[#allocation8 + $0x6] sm:$0x3] %v573
    %v575 = vsub.f32 %v571, %v573
    %v576 = vadd.f32 %v575, %v546
    %v577 = vfloor.f32 %v576
    %v578 = vmax.f32 %v577, 0.0
    %579 = vst [vmem:[#allocation8 + $0x8] sm:$0x3] %v578
    %v580 = vsub.f32 %v576, %v578
    %v582 = vrot.slane %v546, 2
    %v584 = vadd.f32 %v580, %v582
    %v585 = vfloor.f32 %v584
    %v586 = vmax.f32 %v585, 0.0
    %587 = vst [vmem:[#allocation8 + $0xa] sm:$0x3] %v586
    %v588 = vsub.f32 %v584, %v586
    %v589 = vrot.slane %v546, 4
    %v591 = vadd.f32 %v588, %v589
    %v592 = vfloor.f32 %v591
    %v593 = vmax.f32 %v592, 0.0
    %594 = vst [vmem:[#allocation8 + $0xc] sm:$0x3] %v593
    %v595 = vsub.f32 %v591, %v593
    %v596 = vrot.slane %v546, 6
    %v598 = vadd.f32 %v595, %v596
    %v599 = vfloor.f32 %v598
    %v600 = vmax.f32 %v599, 0.0
    %601 = vst [vmem:[#allocation8 + $0xe] sm:$0x3] %v600
    // Predicated region
    $region46: #{tpu_custom_call.1} parent=1 // pred_check
      _
    $region47: #{tpu_custom_call.1} parent=1 // pred_check_branch
      %603 = sbr.rel (0) target = $region49
    $region48: #{tpu_custom_call.1} parent=1 // pred_region
      %s605 = ssub.s32 256, 256
      %606 = vsyncadd [#allocation5], %s605
      %s607 = sshll.u32 [#allocation8], 4
      %s608 = int_to_ptr.vmem [resolvable:$true] %s607
      %613 = dma.vmem_to_hbm [thread:$0]  %s608, 256, %s9, [#allocation5], 128, 128, 8
    $region49: #{tpu_custom_call.1} parent=1 // pred_fallthru
      _
    // Predicated region
    $region50: #{tpu_custom_call.1} parent=1 // pred_check
      _
    $region51: #{tpu_custom_call.1} parent=1 // pred_check_branch
      %615 = sbr.rel (0) target = $region53
    $region52: #{tpu_custom_call.1} parent=1 // pred_region
      %616 = dma.done [#allocation5], 256
    $region53: #{tpu_custom_call.1} parent=1 // pred_fallthru
      _
    %617 = vsyncpa [#allocation4], 1
    %618 = vsyncpa [#allocation7], 1
    %619 = vsyncpa [#allocation5], 1

</llo_original>
